<compile_context>
chip_gen: v6e
topology: v6e:2x2x1
jax: 0.10.0
libtpu: 0.0.40
codegen_flags: <defaults>
</compile_context>

<pallas_src>
import functools

import numpy as np
import jax
import jax.numpy as jnp
from jax.experimental import pallas as pl
from jax.experimental.pallas import tpu as pltpu

_LANE = 128


def _pdf_flow2_kernel(coef_ref, x_ref, y_ref):
    """Elementwise y = c0*x + c1*sqrt(c2*x^2 + c3) on one (block_rows, W) tile."""
    c_lin = coef_ref[0]   # alpha^2 + 1
    c_sq = coef_ref[1]    # +alpha (direct) / -alpha (inverse)
    c_x2 = coef_ref[2]    # alpha^2 + 2
    c_b2 = coef_ref[3]    # beta^2
    x = x_ref[...].astype(jnp.float32)
    y = c_lin * x + c_sq * jnp.sqrt(c_x2 * (x * x) + c_b2)
    y_ref[...] = y.astype(y_ref.dtype)


def _round_up(v: int, m: int) -> int:
    return ((v + m - 1) // m) * m


def _sublane_multiple(itemsize: int) -> int:
    # 8 for 4-byte, 16 for 2-byte, 32 for 1-byte dtypes.
    return max(8, 32 // max(1, itemsize))


@functools.lru_cache(maxsize=1)
def _tile_budget():
    """(per-tile bytes, vmem_limit_bytes) per TPU generation, safe fallback."""
    try:
        cap = int(pltpu.get_tpu_info().vmem_capacity_bytes)
    except Exception:
        cap = 64 * 1024 * 1024  # conservative: assume v7x-sized VMEM
    if cap >= 128 * 1024 * 1024:          # v5e / v6e
        return 8 * 1024 * 1024, 48 * 1024 * 1024
    return 4 * 1024 * 1024, 32 * 1024 * 1024   # v7x or unknown


def _choose_lane_width(n_elems: int) -> int:
    # Widest lane width (multiple of 128) for which at least one full (8, W)
    # sublane-group of real data exists; keeps padding overhead small for
    # tiny inputs while staying lane-dense.
    for w in (1024, 512, 256, _LANE):
        if n_elems >= 8 * w:
            return w
    return _LANE


def _choose_block_rows(n_rows, width, itemsize, tile_bytes, sublane):
    rows = max(sublane, tile_bytes // max(1, width * itemsize))
    rows = max(sublane, (rows // sublane) * sublane)
    # Ensure >= 2 grid steps (megacore sharding on v7x) when there is enough data.
    if n_rows >= 2 * sublane:
        half = _round_up(-(-n_rows // 2), sublane)
        rows = min(rows, half)
    return max(1, min(rows, n_rows))


def _to_slab(x, tile_bytes):
    """Lane-dense 2D view of x. Returns (x2d, n_valid, was_padded)."""
    n = x.size
    itemsize = x.dtype.itemsize
    sublane = _sublane_multiple(itemsize)
    d_last = x.shape[-1] if x.ndim >= 1 else 1
    # Zero-copy path: last dim already lane-aligned and small enough that a
    # sublane-group of rows still fits inside one tile.
    if x.ndim >= 2 and d_last % _LANE == 0 and d_last * itemsize * sublane <= tile_bytes:
        return x.reshape(-1, d_last), n, False
    # Slab path: flatten, pad the tail to a (sublane x W) multiple.
    width = _choose_lane_width(n)
    chunk = width * sublane
    n_pad = _round_up(n, chunk)
    flat = x.reshape(-1)
    if n_pad != n:
        flat = jnp.pad(flat, (0, n_pad - n))
    return flat.reshape(n_pad // width, width), n, n_pad != n


@functools.partial(
    jax.jit, static_argnames=("tile_bytes", "vmem_limit", "block_rows_override")
)
def _pdf_flow2_forward(alpha, beta, sign, x, *, tile_bytes, vmem_limit,
                       block_rows_override=None):
    orig_shape = x.shape
    if x.size == 0:
        return x

    x2d, n_valid, padded = _to_slab(x, tile_bytes)
    n_rows, width = x2d.shape
    itemsize = x2d.dtype.itemsize
    sublane = _sublane_multiple(itemsize)

    block_rows = _choose_block_rows(n_rows, width, itemsize, tile_bytes, sublane)
    if block_rows_override is not None:
        block_rows = max(1, min(int(block_rows_override), n_rows))

    # Fold the two learned scalars + mode sign into 4 f32 coefficients (SMEM).
    a = alpha.astype(jnp.float32).reshape(())
    b = beta.astype(jnp.float32).reshape(())
    s = sign.astype(jnp.float32).reshape(())
    a2 = a * a
    coef = jnp.stack([a2 + 1.0, s * a, a2 + 2.0, b * b])

    grid = (pl.cdiv(n_rows, block_rows),)
    y2d = pl.pallas_call(
        _pdf_flow2_kernel,
        out_shape=jax.ShapeDtypeStruct((n_rows, width), x2d.dtype),
        grid=grid,
        in_specs=[
            pl.BlockSpec(memory_space=pltpu.MemorySpace.SMEM),       # 4 scalars
            pl.BlockSpec((block_rows, width), lambda i: (i, 0)),     # x tile
        ],
        out_specs=pl.BlockSpec((block_rows, width), lambda i: (i, 0)),
        compiler_params=pltpu.CompilerParams(
            dimension_semantics=("parallel",),
            vmem_limit_bytes=vmem_limit,
        ),
    )(coef, x2d)

    if padded:
        return y2d.reshape(-1)[:n_valid].reshape(orig_shape)
    return y2d.reshape(orig_shape)


class PDFFlowLayer2Pallas:
    """JAX/Pallas re-implementation of PyTorch PDFFlowLayer2.forward."""

    def __init__(self, alpha, beta):
        self.alpha = jnp.asarray(alpha, jnp.float32).reshape(())
        self.beta = jnp.asarray(beta, jnp.float32).reshape(())

    def __call__(self, t, x, mode="direct", block_rows=None):
        assert mode in ("direct", "inverse")
        del t  # present in the PyTorch signature but unused by the computation
        x = jnp.asarray(x)
        sign = jnp.asarray(1.0 if mode == "direct" else -1.0, jnp.float32)
        tile_bytes, vmem_limit = _tile_budget()
        return _pdf_flow2_forward(
            self.alpha, self.beta, sign, x,
            tile_bytes=int(tile_bytes),
            vmem_limit=int(vmem_limit),
            block_rows_override=None if block_rows is None else int(block_rows),
        )


if __name__ == "__main__":
    key = jax.random.PRNGKey(0)
    k_beta, k_alpha, k_x, k_x2, k_t = jax.random.split(key, 5)

    # Mirror the PyTorch parameter init: beta ~ U(0,1), alpha ~ N(0,1).
    beta = jax.random.uniform(k_beta, (1,), dtype=jnp.float32)
    alpha = jax.random.normal(k_alpha, (1,), dtype=jnp.float32)

    # Small test shapes. The first deliberately has a last dim that is NOT a
    # multiple of 128 (exercises the padded lane-dense slab path); the second
    # is lane-aligned (zero-copy reshape path).
    B, S, D = 4, 8, 48
    x = jax.random.normal(k_x, (B, S, D), dtype=jnp.float32)
    x_aligned = jax.random.normal(k_x2, (2, 4, 128), dtype=jnp.float32)
    t = jax.random.normal(k_t, (B,), dtype=jnp.float32)  # unused by the module

    layer = PDFFlowLayer2Pallas(alpha, beta)

    y_direct = jax.block_until_ready(layer(t, x, mode="direct"))
    y_direct_tiled = jax.block_until_ready(layer(t, x, mode="direct", block_rows=8))
    y_inverse = jax.block_until_ready(layer(t, x, mode="inverse"))
    y_aligned = jax.block_until_ready(layer(t, x_aligned, mode="direct"))

    a = float(alpha[0])
    b = float(beta[0])

    def ref(xn, sgn):
        xn = np.asarray(xn, dtype=np.float64)
        s = np.sqrt((a * a + 2.0) * xn * xn + b * b)
        return (a * a + 1.0) * xn + sgn * a * s

    np.testing.assert_allclose(np.asarray(y_direct), ref(x, 1.0), rtol=1e-5, atol=1e-5)
    np.testing.assert_allclose(np.asarray(y_direct_tiled), ref(x, 1.0), rtol=1e-5, atol=1e-5)
    np.testing.assert_allclose(np.asarray(y_inverse), ref(x, -1.0), rtol=1e-5, atol=1e-5)
    np.testing.assert_allclose(np.asarray(y_aligned), ref(x_aligned, 1.0), rtol=1e-5, atol=1e-5)
    assert y_direct.shape == x.shape and y_direct.dtype == x.dtype
    assert y_aligned.shape == x_aligned.shape

    print("KERNEL_OK")
</pallas_src>

<mosaic_0001>
module attributes {stable_mosaic.version = 11 : i64} {
  func.func @_pdf_flow2_kernel(%arg0: i32, %arg1: memref<4xf32, #tpu.memory_space<smem>>, %arg2: memref<8x128xf32, #tpu.memory_space<vmem>>, %arg3: memref<8x128xf32, #tpu.memory_space<vmem>>) attributes {dimension_semantics = [#tpu.dimension_semantics<parallel>], iteration_bounds = array<i64: 2>, scalar_prefetch = 0 : i64, scratch_operands = 0 : i64, tpu.core_type = #tpu.core_type<tc>, window_params = [{transform_indices = @transform_0, window_bounds = array<i64: 4>}, {transform_indices = @transform_1, window_bounds = array<i64: 8, 128>}, {transform_indices = @transform_2, window_bounds = array<i64: 8, 128>}]} {
    %c0 = arith.constant 0 : index
    %0 = memref.load %arg1[%c0] : memref<4xf32, #tpu.memory_space<smem>>
    %c1 = arith.constant 1 : index
    %1 = memref.load %arg1[%c1] : memref<4xf32, #tpu.memory_space<smem>>
    %c2 = arith.constant 2 : index
    %2 = memref.load %arg1[%c2] : memref<4xf32, #tpu.memory_space<smem>>
    %c3 = arith.constant 3 : index
    %3 = memref.load %arg1[%c3] : memref<4xf32, #tpu.memory_space<smem>>
    %c0_0 = arith.constant 0 : index
    %c0_1 = arith.constant 0 : index
    %4 = vector.load %arg2[%c0_0, %c0_1] : memref<8x128xf32, #tpu.memory_space<vmem>>, vector<8x128xf32>
    %5 = vector.broadcast %0 : f32 to vector<8x128xf32>
    %6 = arith.mulf %5, %4 : vector<8x128xf32>
    %7 = arith.mulf %4, %4 : vector<8x128xf32>
    %8 = vector.broadcast %2 : f32 to vector<8x128xf32>
    %9 = arith.mulf %8, %7 : vector<8x128xf32>
    %10 = vector.broadcast %3 : f32 to vector<8x128xf32>
    %11 = arith.addf %9, %10 : vector<8x128xf32>
    %12 = math.sqrt %11 : vector<8x128xf32>
    %13 = vector.broadcast %1 : f32 to vector<8x128xf32>
    %14 = arith.mulf %13, %12 : vector<8x128xf32>
    %15 = arith.addf %6, %14 : vector<8x128xf32>
    %c0_2 = arith.constant 0 : index
    %c0_3 = arith.constant 0 : index
    %16 = vector.load %arg3[%c0_2, %c0_3] : memref<8x128xf32, #tpu.memory_space<vmem>>, vector<8x128xf32>
    tpu.vector_store %arg3[%c0_2, %c0_3], %15 {strides = array<i32>} : memref<8x128xf32, #tpu.memory_space<vmem>>, vector<8x128xf32>,
    return
  }
  func.func @transform_0(%arg0: i32) -> i32 {
    %c0_i32 = arith.constant 0 : i32
    %c0_i32_0 = arith.constant 0 : i32
    return %c0_i32 : i32
  }
  func.func @transform_1(%arg0: i32) -> (i32, i32) {
    %c0_i32 = arith.constant 0 : i32
    %c0_i32_0 = arith.constant 0 : i32
    return %arg0, %c0_i32 : i32, i32
  }
  func.func @transform_2(%arg0: i32) -> (i32, i32) {
    %c0_i32 = arith.constant 0 : i32
    %c0_i32_0 = arith.constant 0 : i32
    return %arg0, %c0_i32 : i32, i32
  }
}

</mosaic_0001>

<llo_original>
// kernel: _pdf_flow2_forward.1
$region0: #{_pdf_flow2_forward.1}
  #allocation0 [shape = 'u32[]', space=smem, size = 0x4, offset = 0x4, fixed_abs, tag = 'smem constant byte address 0x4 - core index']
  #allocation1 [shape = 'u32[144,128]{1,0:T(1,128)}', space=vmem, size = 0x12000, scoped, tag = 'internal scratch']
  %s0 = inlined_call_operand.vmem [shape: f32[4], index: 0, kind: input, shape index: {}]
  %s1 = inlined_call_operand.vmem [shape: f32[16,128], index: 1, kind: input, shape index: {}]
  %s2 = inlined_call_operand.vmem [shape: f32[16,128], index: 2, kind: output, shape index: {}]
  %s3 = sld [smem:[#allocation0]]
  $region45: #{_pdf_flow2_forward.1} parent=0
    _
  %s5 = ssub.s32 1, %s3
  %s6 = scalar_select 0, %s5, %s3
  $region1: #{_pdf_flow2_forward.1} parent=0
    #allocation2 [shape = 'u8[512]{0}', space=smem, size = 0x200, scoped, tag = 'input window, operand 0, single buffered']
    #allocation3 [shape = 's32[2]{0}', space=sflag, size = 0x8, scoped, tag = 'scoped memory for _pdf_flow2_forward.1']
    %7 = vsyncpa [#allocation3], 0
    loop: start=0, step=1, limit=4
    $region2: #{_pdf_flow2_forward.1} parent=1 // loop_pre_header
      _
    $region3: #{_pdf_flow2_forward.1} parent=1 // loop_header
      %s9 = sphi 0, %s13
      %p10 = scmp.ge.s32.totalorder %s9, 4
      %s17 = sphi 0, %s17
      %s19 = sphi 0, %s17
      %s20 = sphi 0, %s19
      %s34 = sphi 0, %s20
      %s40 = sphi 0, %s42
      %s43 = sphi 0, %s40
      %s44 = sphi 0, %s43
      %s60 = sphi 0, %s44
      %s66 = sphi 0, %s68
      %s69 = sphi 0, %s66
      %s70 = sphi 0, %s69
      %s86 = sphi 0, %s70
    $region4: #{_pdf_flow2_forward.1} parent=1 // loop_header_branch
      %12 = sbr.rel (%p10) target = $region8
    $region5: #{_pdf_flow2_forward.1} parent=1 // loop_body
      %s14 = ssub.s32 %s9, 1
      %s15 = ssub.s32 %s9, 2
      %s16 = sadd.s32 %s9, 1
      %s18 = sadd.s32 %s17, 1
      %p21 = scmp.eq.s32.totalorder %s9, 1
      %p22 = scmp.ne.s32.totalorder %s17, %s19
      %p23 = scmp.eq.s32.totalorder %s9, 0
      %p24 = por %p22, %p23
      %p25 = scmp.ne.s32.totalorder %s17, %s19
      %p26 = scmp.eq.s32.totalorder %s14, 1
      %p27 = por %p25, %p26
      %p28 = scmp.ne.s32.totalorder %s19, %s20
      %p29 = scmp.eq.s32.totalorder %s14, 0
      %p30 = por %p28, %p29
      %p31 = scmp.ne.s32.totalorder %s19, %s20
      %p32 = scmp.eq.s32.totalorder %s15, 1
      %p33 = por %p31, %p32
      %p35 = scmp.ne.s32.totalorder %s20, %s34
      %p36 = scmp.eq.s32.totalorder %s15, 0
      %p37 = por %p35, %p36
      %s38 = ssub.s32 %s9, %s16
      %p39 = scmp.eq.s32.totalorder %s38, 0
      %s41 = sadd.s32 %s40, 1
      %s42 = scalar_select %p39, %s40, %s41
      %p45 = pneg %p39
      %p46 = scmp.eq.s32.totalorder %s9, 1
      %p47 = por %p45, %p46
      %p48 = scmp.ne.s32.totalorder %s40, %s43
      %p49 = scmp.eq.s32.totalorder %s9, 0
      %p50 = por %p48, %p49
      %p51 = scmp.ne.s32.totalorder %s40, %s43
      %p52 = scmp.eq.s32.totalorder %s14, 1
      %p53 = por %p51, %p52
      %p54 = scmp.ne.s32.totalorder %s43, %s44
      %p55 = scmp.eq.s32.totalorder %s14, 0
      %p56 = por %p54, %p55
      %p57 = scmp.ne.s32.totalorder %s43, %s44
      %p58 = scmp.eq.s32.totalorder %s15, 1
      %p59 = por %p57, %p58
      %p61 = scmp.ne.s32.totalorder %s44, %s60
      %p62 = scmp.eq.s32.totalorder %s15, 0
      %p63 = por %p61, %p62
      %s64 = ssub.s32 %s9, %s16
      %p65 = scmp.eq.s32.totalorder %s64, 0
      %s67 = sadd.s32 %s66, 1
      %s68 = scalar_select %p65, %s66, %s67
      %p71 = pneg %p65
      %p72 = scmp.eq.s32.totalorder %s9, 1
      %p73 = por %p71, %p72
      %p74 = scmp.ne.s32.totalorder %s66, %s69
      %p75 = scmp.eq.s32.totalorder %s9, 0
      %p76 = por %p74, %p75
      %p77 = scmp.ne.s32.totalorder %s66, %s69
      %p78 = scmp.eq.s32.totalorder %s14, 1
      %p79 = por %p77, %p78
      %p80 = scmp.ne.s32.totalorder %s69, %s70
      %p81 = scmp.eq.s32.totalorder %s14, 0
      %p82 = por %p80, %p81
      %p83 = scmp.ne.s32.totalorder %s69, %s70
      %p84 = scmp.eq.s32.totalorder %s15, 1
      %p85 = por %p83, %p84
      %p87 = scmp.ne.s32.totalorder %s70, %s86
      %p88 = scmp.eq.s32.totalorder %s15, 0
      %p89 = por %p87, %p88
      %p90 = scmp.le.s32.totalorder 1, %s9
      %p91 = scmp.lt.s32.totalorder %s9, 3
      %p92 = pnand %p90, %p91
      %p93 = pneg %p92
      // Predicated region
      $region9: #{_pdf_flow2_forward.1} parent=5 // pred_check
        _
      $region10: #{_pdf_flow2_forward.1} parent=5 // pred_check_branch
        %95 = sbr.rel (%p92) target = $region12
      $region11: #{_pdf_flow2_forward.1} parent=5 // pred_region
        %s96 = ssub.s32 %s9, 1
        // Predicated region
        $region13: #{_pdf_flow2_forward.1} parent=11 // pred_check
          %p97 = pneg %p30
        $region14: #{_pdf_flow2_forward.1} parent=11 // pred_check_branch
          %99 = sbr.rel (%p97) target = $region16
        $region15: #{_pdf_flow2_forward.1} parent=11 // pred_region
          %s101 = ssub.s32 16, 16
          %102 = vsyncadd [#allocation3], %s101
          %s104 = sshll.u32 %s0, 4
          %s105 = int_to_ptr.vmem [resolvable:$true] %s104
          %107 = dma.vmem_to_smem %s105, 16, [#allocation2], [#allocation3]
        $region16: #{_pdf_flow2_forward.1} parent=11 // pred_fallthru
          _
      $region12: #{_pdf_flow2_forward.1} parent=5 // pred_fallthru
        _
      %p108 = scmp.lt.s32.totalorder %s9, 2
      // Predicated region
      $region17: #{_pdf_flow2_forward.1} parent=5 // pred_check
        %p109 = pneg %p108
      $region18: #{_pdf_flow2_forward.1} parent=5 // pred_check_branch
        %111 = sbr.rel (%p109) target = $region20
      $region19: #{_pdf_flow2_forward.1} parent=5 // pred_region
        // Predicated region
        $region21: #{_pdf_flow2_forward.1} parent=19 // pred_check
          %p112 = pneg %p50
        $region22: #{_pdf_flow2_forward.1} parent=19 // pred_check_branch
          %114 = sbr.rel (%p112) target = $region24
        $region23: #{_pdf_flow2_forward.1} parent=19 // pred_region
          %p115 = scmp.lt.s32.totalorder %s9, 1
          %s116 = scalar_select %p115, %s9, 1
          %s117 = smul.addr %s116, 8
          %s118 = scalar_lea.vmem %s1, %s117
        $region24: #{_pdf_flow2_forward.1} parent=19 // pred_fallthru
          _
      $region20: #{_pdf_flow2_forward.1} parent=5 // pred_fallthru
        _
      %p119 = scmp.le.s32.totalorder 1, %s9
      %p120 = scmp.lt.s32.totalorder %s9, 3
      %p121 = pnand %p119, %p120
      %p122 = pneg %p121
      // Predicated region
      $region25: #{_pdf_flow2_forward.1} parent=5 // pred_check
        _
      $region26: #{_pdf_flow2_forward.1} parent=5 // pred_check_branch
        %124 = sbr.rel (%p121) target = $region28
      $region27: #{_pdf_flow2_forward.1} parent=5 // pred_region
        %s125 = ssub.s32 %s9, 1
        // Predicated region
        $region29: #{_pdf_flow2_forward.1} parent=27 // pred_check
          %p126 = pneg %p30
        $region30: #{_pdf_flow2_forward.1} parent=27 // pred_check_branch
          %128 = sbr.rel (%p126) target = $region32
        $region31: #{_pdf_flow2_forward.1} parent=27 // pred_region
          %129 = dma.done [#allocation3], 16
        $region32: #{_pdf_flow2_forward.1} parent=27 // pred_fallthru
          _
        %130 = sfence
        %p131 = pneg %p30
        %p132 = pneg %p27
        %p133 = scmp.lt.s32.totalorder %s14, 1
        %s134 = scalar_select %p133, %s14, 1
        %s135 = smul.addr %s134, 8
        %s136 = scalar_lea.vmem %s1, %s135
        %p137 = pneg %p56
        %p138 = pneg %p53
        %p139 = pneg %p82
        %p140 = pneg %p79
        %p141 = scmp.lt.s32.totalorder %s14, 1
        %s142 = scalar_select %p141, %s14, 1
        %s143 = smul.addr %s142, 8
        %s144 = scalar_lea.vmem %s2, %s143
        %p145 = scmp.lt.s32.totalorder %s14, 1
        %s146 = scalar_select %p145, %s14, 1
        %s147 = smul.addr %s146, 8
        %s148 = scalar_lea.vmem %s1, %s147
        %p149 = scmp.lt.s32.totalorder %s14, 1
        %s150 = scalar_select %p149, %s14, 1
        %s151 = smul.addr %s150, 8
        %s152 = scalar_lea.vmem %s2, %s151
        %s153 = sld [smem:[#allocation2]]
        %s154 = sld [smem:[#allocation2 + $0x1]]
        %s155 = sld [smem:[#allocation2 + $0x2]]
        %s156 = sld [smem:[#allocation2 + $0x3]]
        %v157 = vld [vmem:[%s148] sm:$0xff]
        %v158 = vstv %s153
        %v159 = vmul.f32 %v158, %v157
        %v160 = vmul.f32 %v157, %v157
        %v161 = vstv %s155
        %v162 = vmul.f32 %v161, %v160
        %v163 = vstv %s156
        %v164 = vadd.f32 %v162, %v163
        %v165 = vrsqrt.pop %v164
        %v166 = vmul.f32 %v164, %v165
        %vm167 = vcmp.eq.f32.partialorder %v164, inf
        %v168 = vsel %vm167, %v164, %v166
        %vm169 = vcmp.eq.f32.partialorder %v164, 0.0
        %v170 = vand.u32 %v164, 2147483648
        %v171 = vsel %vm169, %v170, %v168
        %v172 = vstv %s154
        %v173 = vmul.f32 %v172, %v171
        %v174 = vadd.f32 %v159, %v173
        %175 = vst [vmem:[%s152] sm:$0xff] %v174
        %p176 = scmp.lt.s32.totalorder %s14, 1
        %s177 = scalar_select %p176, %s14, 1
        %s178 = smul.addr %s177, 8
        %s179 = scalar_lea.vmem %s2, %s178
        // Predicated region
        $region33: #{_pdf_flow2_forward.1} parent=27 // pred_check
          %p180 = pneg %p79
        $region34: #{_pdf_flow2_forward.1} parent=27 // pred_check_branch
          %182 = sbr.rel (%p180) target = $region36
        $region35: #{_pdf_flow2_forward.1} parent=27 // pred_region
          _
        $region36: #{_pdf_flow2_forward.1} parent=27 // pred_fallthru
          _
      $region28: #{_pdf_flow2_forward.1} parent=5 // pred_fallthru
        _
      %p183 = scmp.le.s32.totalorder 2, %s9
      // Predicated region
      $region37: #{_pdf_flow2_forward.1} parent=5 // pred_check
        %p184 = pneg %p183
      $region38: #{_pdf_flow2_forward.1} parent=5 // pred_check_branch
        %186 = sbr.rel (%p184) target = $region40
      $region39: #{_pdf_flow2_forward.1} parent=5 // pred_region
        %s187 = ssub.s32 %s9, 2
        // Predicated region
        $region41: #{_pdf_flow2_forward.1} parent=39 // pred_check
          %p188 = pneg %p85
        $region42: #{_pdf_flow2_forward.1} parent=39 // pred_check_branch
          %190 = sbr.rel (%p188) target = $region44
        $region43: #{_pdf_flow2_forward.1} parent=39 // pred_region
          %p191 = scmp.lt.s32.totalorder %s15, 1
          %s192 = scalar_select %p191, %s15, 1
          %s193 = smul.addr %s192, 8
          %s194 = scalar_lea.vmem %s2, %s193
        $region44: #{_pdf_flow2_forward.1} parent=39 // pred_fallthru
          _
      $region40: #{_pdf_flow2_forward.1} parent=5 // pred_fallthru
        _
    $region6: #{_pdf_flow2_forward.1} parent=1 // loop_footer
      %s13 = sadd.s32 1, %s9
    $region7: #{_pdf_flow2_forward.1} parent=1 // loop_footer_branch
      %8 = sbr.rel target = $region3
    $region8: #{_pdf_flow2_forward.1} parent=1 // loop_exit
      _
    %195 = vsyncpa [#allocation3], 1
    %s196 = scalar_lea.sflag [#allocation3], 1
    %197 = vsyncpa %s196, 1

</llo_original>
